<compile_context>
chip_gen: v7x
topology: tpu7x:2x2x1
jax: 0.10.0
libtpu: 0.0.40
codegen_flags: <defaults>
</compile_context>

<pallas_src>
import math

import jax
import jax.numpy as jnp
from jax.experimental import pallas as pl
from jax.experimental.pallas import tpu as pltpu

_LANES = 128      # vreg lane width: lane-dense trailing dim -> unmasked vst
_SUBLANES = 8     # sublane granularity: row-block sizes must be multiples of 8


def _identity_kernel(x_ref, o_ref):
    # Pure pass-through of the current VMEM tile.
    o_ref[...] = x_ref[...]


def _block_budget_bytes():
    """Per-block byte budget: ~8 MiB, capped so 4 in-flight blocks (2 x
    double-buffer x (in+out)) plus headroom always fit in physical VMEM."""
    try:
        vmem = int(pltpu.get_tpu_info().vmem_capacity_bytes)
    except Exception:
        vmem = 64 << 20  # conservative fallback (v7x per-TC VMEM)
    return min(8 << 20, vmem // 8)


def _copy_2d(x2):
    """Tiled, pipelined VMEM copy of a 2-D array (rows tiled, lane-dense cols)."""
    R, C = x2.shape
    itemsize = jnp.dtype(x2.dtype).itemsize

    budget = _block_budget_bytes()
    rows_budget = (budget // (C * itemsize)) // _SUBLANES * _SUBLANES
    rows_budget = max(_SUBLANES, rows_budget)

    if R <= rows_budget:
        # Fits in one block. For mid/large tensors split into >=2 grid steps so
        # v7x's two TensorCores both drive DMA (parallel axis); harmless on
        # single-TC v5e/v6e.
        block_rows = R
        if R >= 2 * _SUBLANES and R * C * itemsize >= (2 << 20):
            half = (R + 1) // 2
            block_rows = ((half + _SUBLANES - 1) // _SUBLANES) * _SUBLANES
    else:
        block_rows = rows_budget

    grid = (pl.cdiv(R, block_rows),)
    block_bytes = block_rows * C * itemsize
    # 2 (double-buffer) x 2 (in + out) blocks + headroom; raise the default
    # 16/32 MiB scoped-VMEM limit so the large tiles compile on every chip.
    vmem_limit = int(max(32 << 20, 4 * block_bytes + (4 << 20)))

    return pl.pallas_call(
        _identity_kernel,
        out_shape=jax.ShapeDtypeStruct((R, C), x2.dtype),
        grid=grid,
        in_specs=[pl.BlockSpec((block_rows, C), lambda i: (i, 0))],
        out_specs=pl.BlockSpec((block_rows, C), lambda i: (i, 0)),
        # Only saves a copy if the caller donates the buffer (jit
        # donate_argnums) or the input is a temporary inside a larger jit;
        # at top level XLA inserts a defensive copy (correctness unaffected).
        input_output_aliases={0: 0},
        compiler_params=pltpu.CompilerParams(
            dimension_semantics=("parallel",),
            vmem_limit_bytes=vmem_limit,
        ),
    )(x2)


def _identity_pallas(x):
    """Identity forward pass routed through a Pallas copy kernel."""
    shape = x.shape
    total = math.prod(shape) if shape else 1

    if total == 0:
        return x  # degenerate empty tensor: nothing to copy

    if total % _LANES == 0:
        # Lane-dense (R, 128) view: full unmasked vst, tiled & pipelined.
        out2 = _copy_2d(x.reshape(total // _LANES, _LANES))
        return out2.reshape(shape)

    # Non-%128 element count: lane-dense bulk + tiny (<128 element) tail so
    # large odd-sized tensors never land in a single un-tiled VMEM block.
    flat = x.reshape(total)
    bulk = (total // _LANES) * _LANES
    if bulk == 0:
        return _copy_2d(flat.reshape(1, total)).reshape(shape)
    body = _copy_2d(flat[:bulk].reshape(bulk // _LANES, _LANES)).reshape(bulk)
    tail = _copy_2d(flat[bulk:].reshape(1, total - bulk)).reshape(total - bulk)
    return jnp.concatenate([body, tail]).reshape(shape)


def identity(x, *, use_kernel=False):
    """Identity forward pass.

    By default this is a true no-op (returns `x` unchanged, zero HBM traffic),
    which is the optimal implementation of nn.Identity. Set `use_kernel=True`
    to route the tensor through the Pallas copy kernel (e.g. when an explicit
    kernel boundary is required).
    """
    if not use_kernel:
        return x
    return _identity_pallas(x)


if __name__ == "__main__":
    key = jax.random.PRNGKey(0)
    # Small NCHW-shaped input: batch=2, channels=4, spatial=16x16
    x = jax.random.normal(key, (2, 4, 16, 16), dtype=jnp.float32)

    # Default (optimal) path: pure pass-through.
    y0 = jax.block_until_ready(identity(x))
    assert jnp.array_equal(y0, x)

    # Flag-gated Pallas kernel path.
    y = jax.block_until_ready(identity(x, use_kernel=True))
    assert y.shape == x.shape, f"shape mismatch: {y.shape} vs {x.shape}"
    assert y.dtype == x.dtype, f"dtype mismatch: {y.dtype} vs {x.dtype}"
    assert jnp.array_equal(y, x), "identity output differs from input"

    # Non-128-divisible shapes: tiny (<128 elems) and bulk+tail paths.
    x_odd = jax.random.normal(key, (3, 5, 7), dtype=jnp.bfloat16)
    y_odd = jax.block_until_ready(identity(x_odd, use_kernel=True))
    assert jnp.array_equal(y_odd, x_odd)

    x_bt = jax.random.normal(key, (5, 37), dtype=jnp.float32)  # 185 = 128 + 57
    y_bt = jax.block_until_ready(identity(x_bt, use_kernel=True))
    assert jnp.array_equal(y_bt, x_bt)

    # Larger array exercising the multi-step, dual-TC-parallel pipelined path.
    x_big = jax.random.normal(key, (4096, 256), dtype=jnp.float32)
    y_big = jax.block_until_ready(identity(x_big, use_kernel=True))
    assert jnp.array_equal(y_big, x_big)

    print("KERNEL_OK")
</pallas_src>

<mosaic_0001>
module attributes {stable_mosaic.version = 11 : i64} {
  func.func @_identity_kernel(%arg0: i32, %arg1: memref<16x128xf32, #tpu.memory_space<vmem>>, %arg2: memref<16x128xf32, #tpu.memory_space<vmem>>) attributes {dimension_semantics = [#tpu.dimension_semantics<parallel>], iteration_bounds = array<i64: 1>, scalar_prefetch = 0 : i64, scratch_operands = 0 : i64, tpu.core_type = #tpu.core_type<tc>, window_params = [{transform_indices = @transform_0, window_bounds = array<i64: 16, 128>}, {transform_indices = @transform_1, window_bounds = array<i64: 16, 128>}]} {
    %c0 = arith.constant 0 : index
    %c0_0 = arith.constant 0 : index
    %0 = vector.load %arg1[%c0, %c0_0] : memref<16x128xf32, #tpu.memory_space<vmem>>, vector<16x128xf32>
    %c0_1 = arith.constant 0 : index
    %c0_2 = arith.constant 0 : index
    %1 = vector.load %arg2[%c0_1, %c0_2] : memref<16x128xf32, #tpu.memory_space<vmem>>, vector<16x128xf32>
    tpu.vector_store %arg2[%c0_1, %c0_2], %0 {strides = array<i32>} : memref<16x128xf32, #tpu.memory_space<vmem>>, vector<16x128xf32>,
    return
  }
  func.func @transform_0(%arg0: i32) -> (i32, i32) {
    %c0_i32 = arith.constant 0 : i32
    %c0_i32_0 = arith.constant 0 : i32
    return %arg0, %c0_i32 : i32, i32
  }
  func.func @transform_1(%arg0: i32) -> (i32, i32) {
    %c0_i32 = arith.constant 0 : i32
    %c0_i32_0 = arith.constant 0 : i32
    return %arg0, %c0_i32 : i32, i32
  }
}

</mosaic_0001>

<llo_original>
// kernel: tpu_custom_call.1
$region0: #{tpu_custom_call.1}
  #allocation0 [shape = 'u32[]', space=smem, size = 0x4, offset = 0x4, fixed_abs, tag = 'smem constant byte address 0x4 - core index']
  #allocation1 [shape = 'u32[144,128]{1,0:T(1,128)}', space=vmem, size = 0x12000, scoped, tag = 'internal scratch']
  %s0 = inlined_call_operand.hbm [shape: f32[16,128], index: 0, kind: input, shape index: {}, may-alias: {0,1}]
  %s1 = inlined_call_operand.hbm [shape: f32[16,128], index: 1, kind: output, shape index: {}, may-alias: {0,1}]
  %s2 = sld [smem:[#allocation0]]
  $region18: #{tpu_custom_call.1} parent=0
    _
  %s4 = ssub.s32 1, %s2
  %s5 = scalar_select 0, %s4, %s2
  $region1: #{tpu_custom_call.1} parent=0
    #allocation2 [shape = 'u8[8192]{0}', space=vmem, size = 0x2000, scoped, tag = 'input window, operand 0, single buffered']
    #allocation3 [shape = 's32[1]{0}', space=sflag, size = 0x4, scoped, tag = 'scoped memory for tpu_custom_call.1']
    #allocation4 [shape = 's32[1]{0}', space=sflag, size = 0x4, scoped, tag = 'scoped memory for tpu_custom_call.1']
    #allocation5 [shape = 'u8[8192]{0}', space=vmem, size = 0x2000, scoped, tag = 'output window, operand 0, single buffered']
    %6 = vsyncpa [#allocation3], 0
    %7 = vsyncpa [#allocation4], 0
    // Predicated region
    $region2: #{tpu_custom_call.1} parent=1 // pred_check
      _
    $region3: #{tpu_custom_call.1} parent=1 // pred_check_branch
      %9 = sbr.rel (0) target = $region5
    $region4: #{tpu_custom_call.1} parent=1 // pred_region
      %s11 = ssub.s32 256, 256
      %12 = vsyncadd [#allocation3], %s11
      %s13 = sshll.u32 [#allocation2], 4
      %s14 = int_to_ptr.vmem [resolvable:$true] %s13
      %19 = dma.hbm_to_vmem [thread:$0]  %s0, 256, %s14, [#allocation3], 128, 128, 8
    $region5: #{tpu_custom_call.1} parent=1 // pred_fallthru
      _
    // Predicated region
    $region6: #{tpu_custom_call.1} parent=1 // pred_check
      _
    $region7: #{tpu_custom_call.1} parent=1 // pred_check_branch
      %21 = sbr.rel (0) target = $region9
    $region8: #{tpu_custom_call.1} parent=1 // pred_region
      %22 = dma.done [#allocation3], 256
    $region9: #{tpu_custom_call.1} parent=1 // pred_fallthru
      _
    %v23 = vld [vmem:[#allocation2] sm:$0xff]
    %v24 = vld [vmem:[#allocation2 + $0x8] sm:$0xff]
    %25 = vst [vmem:[#allocation5] sm:$0xff] %v23
    %26 = vst [vmem:[#allocation5 + $0x8] sm:$0xff] %v24
    // Predicated region
    $region10: #{tpu_custom_call.1} parent=1 // pred_check
      _
    $region11: #{tpu_custom_call.1} parent=1 // pred_check_branch
      %28 = sbr.rel (0) target = $region13
    $region12: #{tpu_custom_call.1} parent=1 // pred_region
      %s30 = ssub.s32 256, 256
      %31 = vsyncadd [#allocation4], %s30
      %s32 = sshll.u32 [#allocation5], 4
      %s33 = int_to_ptr.vmem [resolvable:$true] %s32
      %38 = dma.vmem_to_hbm [thread:$0]  %s33, 256, %s1, [#allocation4], 128, 128, 8
    $region13: #{tpu_custom_call.1} parent=1 // pred_fallthru
      _
    // Predicated region
    $region14: #{tpu_custom_call.1} parent=1 // pred_check
      _
    $region15: #{tpu_custom_call.1} parent=1 // pred_check_branch
      %40 = sbr.rel (0) target = $region17
    $region16: #{tpu_custom_call.1} parent=1 // pred_region
      %41 = dma.done [#allocation4], 256
    $region17: #{tpu_custom_call.1} parent=1 // pred_fallthru
      _
    %42 = vsyncpa [#allocation3], 1
    %43 = vsyncpa [#allocation4], 1

</llo_original>
